<compile_context>
chip_gen: v6e
topology: v6e:2x2x1
jax: 0.10.0
libtpu: 0.0.40
codegen_flags: <defaults>
</compile_context>

<pallas_src>
import numpy as np
import jax
import jax.numpy as jnp
from jax.experimental import pallas as pl
from jax.experimental.pallas import tpu as pltpu


def _round_up(x, m):
    return ((x + m - 1) // m) * m


def orthogonal_init(key, out_features, in_features, gain):
    """Deterministic orthogonal init matching nn.init.orthogonal_ semantics."""
    rows, cols = out_features, in_features
    flat = jax.random.normal(key, (max(rows, cols), min(rows, cols)), dtype=jnp.float32)
    q, r = jnp.linalg.qr(flat)
    # sign correction so the decomposition is unique/deterministic
    q = q * jnp.sign(jnp.diag(r))[None, :]
    if rows < cols:
        q = q.T
    w_pt = gain * q[:rows, :cols]          # PyTorch layout (out, in)
    return w_pt.T                          # kernel layout (in, out)


def mlp_actor_kernel(x_ref, w1_ref, b1_ref, w2_ref, b2_ref, wo_ref, bo_ref, o_ref):
    # Hidden layer 1: Linear + Tanh.  bf16 MXU inputs, f32 accumulate, f32 tanh.
    x = x_ref[...].astype(jnp.bfloat16)
    h = jnp.tanh(
        jnp.dot(x, w1_ref[...], preferred_element_type=jnp.float32) + b1_ref[...]
    )
    # Hidden layer 2: Linear + Tanh.
    h = jnp.tanh(
        jnp.dot(h.astype(jnp.bfloat16), w2_ref[...],
                preferred_element_type=jnp.float32) + b2_ref[...]
    )
    # Output layer: Linear, no activation.  Output slab is lane-dense (128-wide).
    o_ref[...] = (
        jnp.dot(h.astype(jnp.bfloat16), wo_ref[...],
                preferred_element_type=jnp.float32) + bo_ref[...]
    )


def _pick_batch_tile(batch, obs_dim, h1, h2, n_out,
                     vmem_budget_bytes=24 * 1024 * 1024, max_tile=1024):
    """Largest batch tile keeping double-buffered streams + activations inside a
    conservative VMEM budget (valid on v5e/v6e/v7x default scoped limits)."""
    per_row = (
        2 * obs_dim * 4              # double-buffered obs stream (f32)
        + 2 * n_out * 4              # double-buffered padded output stream (f32)
        + (h1 + h2) * 4              # f32 intermediate activations
        + (obs_dim + h1 + h2) * 2    # bf16 copies fed to the MXU
    )
    tm = vmem_budget_bytes // max(per_row, 1)
    tm = max(8, min(max_tile, (tm // 8) * 8))
    tm = min(tm, _round_up(batch, 8))
    return tm


def mlp_actor_forward(obs, params, max_batch_tile=1024):
    """obs: (batch, obs_dim) f32.  Returns (batch, act_dim) f32."""
    w1, b1, w2, b2, wo, bo = params
    batch, obs_dim = obs.shape
    h1 = w1.shape[1]
    h2 = w2.shape[1]
    act_dim = wo.shape[1]

    # Lane-dense output: pad the output feature dim up to a multiple of 128 so
    # the final store is an unmasked full-lane vst; slice back in the wrapper.
    n_out = _round_up(act_dim, 128)
    wo_p = jnp.pad(wo, ((0, 0), (0, n_out - act_dim)))
    bo_p = jnp.pad(bo, ((0, 0), (0, n_out - act_dim)))

    # bf16 weights for the MXU (f32 accumulate in-kernel); biases stay f32.
    w1_b = w1.astype(jnp.bfloat16)
    w2_b = w2.astype(jnp.bfloat16)
    wo_b = wo_p.astype(jnp.bfloat16)

    # Batch tiling: large tiles amortize the ~0.35 us/step pipeline overhead.
    tm = _pick_batch_tile(batch, obs_dim, h1, h2, n_out, max_tile=max_batch_tile)
    padded_batch = _round_up(batch, tm)
    if padded_batch != batch:
        obs = jnp.pad(obs, ((0, padded_batch - batch), (0, 0)))
    grid = (padded_batch // tm,)

    pinned = lambda shape: pl.BlockSpec(shape, lambda i: (0, 0))

    cost = pl.CostEstimate(
        flops=2 * padded_batch * (obs_dim * h1 + h1 * h2 + h2 * act_dim),
        transcendentals=padded_batch * (h1 + h2),
        bytes_accessed=(obs.size * 4
                        + (w1_b.size + w2_b.size + wo_b.size) * 2
                        + (b1.size + b2.size + bo_p.size) * 4
                        + padded_batch * n_out * 4),
    )

    out = pl.pallas_call(
        mlp_actor_kernel,
        out_shape=jax.ShapeDtypeStruct((padded_batch, n_out), jnp.float32),
        grid=grid,
        in_specs=[
            pl.BlockSpec((tm, obs_dim), lambda i: (i, 0)),   # streamed per tile
            pinned(w1_b.shape), pinned(b1.shape),            # weights stay resident
            pinned(w2_b.shape), pinned(b2.shape),
            pinned(wo_b.shape), pinned(bo_p.shape),
        ],
        out_specs=pl.BlockSpec((tm, n_out), lambda i: (i, 0)),
        compiler_params=pltpu.CompilerParams(
            dimension_semantics=("parallel",)),  # v7x: shard batch across 2 TCs
        cost_estimate=cost,
    )(obs, w1_b, b1, w2_b, b2, wo_b, bo_p)

    return out[:batch, :act_dim]


def jax_reference(obs, params):
    w1, b1, w2, b2, wo, bo = params
    h = jnp.tanh(obs @ w1 + b1)
    h = jnp.tanh(h @ w2 + b2)
    return h @ wo + bo


if __name__ == "__main__":
    # Small shapes consistent with MLPActor(obs_dim, act_dim, hidden_sizes, ...)
    batch = 8
    obs_dim = 16
    hidden_sizes = [32, 32]
    act_dim = 4

    key = jax.random.PRNGKey(0)
    k_obs, k_w1, k_w2, k_wo = jax.random.split(key, 4)

    obs = jax.random.normal(k_obs, (batch, obs_dim), dtype=jnp.float32)

    gain_hidden = float(np.sqrt(2.0))
    w1 = orthogonal_init(k_w1, hidden_sizes[0], obs_dim, gain_hidden)          # (16, 32)
    b1 = jnp.zeros((1, hidden_sizes[0]), dtype=jnp.float32)
    w2 = orthogonal_init(k_w2, hidden_sizes[1], hidden_sizes[0], gain_hidden)  # (32, 32)
    b2 = jnp.zeros((1, hidden_sizes[1]), dtype=jnp.float32)
    wo = orthogonal_init(k_wo, act_dim, hidden_sizes[1], 0.01)                 # (32, 4)
    bo = jnp.zeros((1, act_dim), dtype=jnp.float32)
    params = (w1, b1, w2, b2, wo, bo)

    # Single-tile path (batch=8 -> tile=8, grid=(1,)).
    out = jax.block_until_ready(mlp_actor_forward(obs, params))
    ref = jax_reference(obs, params)
    # bf16 MXU inputs vs f32 reference -> loosened tolerance.
    np.testing.assert_allclose(np.asarray(out), np.asarray(ref), rtol=1e-2, atol=1e-2)

    # Multi-tile grid + batch-padding path (200 rows, tile=64 -> padded to 256, grid=(4,)).
    batch2 = 200
    obs2 = jax.random.normal(jax.random.PRNGKey(1), (batch2, obs_dim), dtype=jnp.float32)
    out2 = jax.block_until_ready(mlp_actor_forward(obs2, params, max_batch_tile=64))
    ref2 = jax_reference(obs2, params)
    np.testing.assert_allclose(np.asarray(out2), np.asarray(ref2), rtol=1e-2, atol=1e-2)

    # TODO(synk): MLPActor's action sampling / log_prob / KL / entropy are
    # abstract (subclass-specific torch.distributions); only the network
    # forward (the hot path) is implemented as a kernel.
    print("KERNEL_OK")
</pallas_src>

<mosaic_0001>
module attributes {stable_mosaic.version = 11 : i64} {
  func.func @mlp_actor_kernel(%arg0: i32, %arg1: memref<8x16xf32, #tpu.memory_space<vmem>>, %arg2: memref<16x32xbf16, #tpu.memory_space<vmem>>, %arg3: memref<1x32xf32, #tpu.memory_space<vmem>>, %arg4: memref<32x32xbf16, #tpu.memory_space<vmem>>, %arg5: memref<1x32xf32, #tpu.memory_space<vmem>>, %arg6: memref<32x128xbf16, #tpu.memory_space<vmem>>, %arg7: memref<1x128xf32, #tpu.memory_space<vmem>>, %arg8: memref<8x128xf32, #tpu.memory_space<vmem>>) attributes {dimension_semantics = [#tpu.dimension_semantics<parallel>], iteration_bounds = array<i64: 1>, scalar_prefetch = 0 : i64, scratch_operands = 0 : i64, tpu.core_type = #tpu.core_type<tc>, window_params = [{transform_indices = @transform_0, window_bounds = array<i64: 8, 16>}, {pipeline_mode = #tpu.pipeline_mode<synchronous>, transform_indices = @transform_1, window_bounds = array<i64: 16, 32>}, {pipeline_mode = #tpu.pipeline_mode<synchronous>, transform_indices = @transform_2, window_bounds = array<i64: 1, 32>}, {pipeline_mode = #tpu.pipeline_mode<synchronous>, transform_indices = @transform_3, window_bounds = array<i64: 32, 32>}, {pipeline_mode = #tpu.pipeline_mode<synchronous>, transform_indices = @transform_4, window_bounds = array<i64: 1, 32>}, {pipeline_mode = #tpu.pipeline_mode<synchronous>, transform_indices = @transform_5, window_bounds = array<i64: 32, 128>}, {pipeline_mode = #tpu.pipeline_mode<synchronous>, transform_indices = @transform_6, window_bounds = array<i64: 1, 128>}, {transform_indices = @transform_7, window_bounds = array<i64: 8, 128>}]} {
    %c0 = arith.constant 0 : index
    %c0_0 = arith.constant 0 : index
    %0 = vector.load %arg1[%c0, %c0_0] : memref<8x16xf32, #tpu.memory_space<vmem>>, vector<8x16xf32>
    %1 = arith.truncf %0 : vector<8x16xf32> to vector<8x16xbf16>
    %c0_1 = arith.constant 0 : index
    %c0_2 = arith.constant 0 : index
    %2 = vector.load %arg2[%c0_1, %c0_2] : memref<16x32xbf16, #tpu.memory_space<vmem>>, vector<16x32xbf16>
    %cst = arith.constant dense<0.000000e+00> : vector<8x32xf32>
    %3 = tpu.matmul %1, %2, %cst {dimension_numbers = #tpu.dot_dimension_numbers<[1], [0], [0], [1], [0, 0, 1, 1], [], []>} : vector<8x16xbf16>, vector<16x32xbf16>, vector<8x32xf32> -> vector<8x32xf32>
    %c0_3 = arith.constant 0 : index
    %c0_4 = arith.constant 0 : index
    %4 = vector.load %arg3[%c0_3, %c0_4] : memref<1x32xf32, #tpu.memory_space<vmem>>, vector<1x32xf32>
    %5 = vector.broadcast %4 : vector<1x32xf32> to vector<8x32xf32>
    %6 = arith.addf %3, %5 : vector<8x32xf32>
    %7 = math.tanh %6 : vector<8x32xf32>
    %8 = arith.truncf %7 : vector<8x32xf32> to vector<8x32xbf16>
    %c0_5 = arith.constant 0 : index
    %c0_6 = arith.constant 0 : index
    %9 = vector.load %arg4[%c0_5, %c0_6] : memref<32x32xbf16, #tpu.memory_space<vmem>>, vector<32x32xbf16>
    %cst_7 = arith.constant dense<0.000000e+00> : vector<8x32xf32>
    %10 = tpu.matmul %8, %9, %cst_7 {dimension_numbers = #tpu.dot_dimension_numbers<[1], [0], [0], [1], [0, 0, 1, 1], [], []>} : vector<8x32xbf16>, vector<32x32xbf16>, vector<8x32xf32> -> vector<8x32xf32>
    %c0_8 = arith.constant 0 : index
    %c0_9 = arith.constant 0 : index
    %11 = vector.load %arg5[%c0_8, %c0_9] : memref<1x32xf32, #tpu.memory_space<vmem>>, vector<1x32xf32>
    %12 = vector.broadcast %11 : vector<1x32xf32> to vector<8x32xf32>
    %13 = arith.addf %10, %12 : vector<8x32xf32>
    %14 = math.tanh %13 : vector<8x32xf32>
    %15 = arith.truncf %14 : vector<8x32xf32> to vector<8x32xbf16>
    %c0_10 = arith.constant 0 : index
    %c0_11 = arith.constant 0 : index
    %16 = vector.load %arg6[%c0_10, %c0_11] : memref<32x128xbf16, #tpu.memory_space<vmem>>, vector<32x128xbf16>
    %cst_12 = arith.constant dense<0.000000e+00> : vector<8x128xf32>
    %17 = tpu.matmul %15, %16, %cst_12 {dimension_numbers = #tpu.dot_dimension_numbers<[1], [0], [0], [1], [0, 0, 1, 1], [], []>} : vector<8x32xbf16>, vector<32x128xbf16>, vector<8x128xf32> -> vector<8x128xf32>
    %c0_13 = arith.constant 0 : index
    %c0_14 = arith.constant 0 : index
    %18 = vector.load %arg7[%c0_13, %c0_14] : memref<1x128xf32, #tpu.memory_space<vmem>>, vector<1x128xf32>
    %19 = vector.broadcast %18 : vector<1x128xf32> to vector<8x128xf32>
    %20 = arith.addf %17, %19 : vector<8x128xf32>
    %c0_15 = arith.constant 0 : index
    %c0_16 = arith.constant 0 : index
    %21 = vector.load %arg8[%c0_15, %c0_16] : memref<8x128xf32, #tpu.memory_space<vmem>>, vector<8x128xf32>
    tpu.vector_store %arg8[%c0_15, %c0_16], %20 {strides = array<i32>} : memref<8x128xf32, #tpu.memory_space<vmem>>, vector<8x128xf32>,
    return
  }
  func.func @transform_0(%arg0: i32) -> (i32, i32) {
    %c0_i32 = arith.constant 0 : i32
    %c0_i32_0 = arith.constant 0 : i32
    return %arg0, %c0_i32 : i32, i32
  }
  func.func @transform_1(%arg0: i32) -> (i32, i32) {
    %c0_i32 = arith.constant 0 : i32
    %c0_i32_0 = arith.constant 0 : i32
    %c0_i32_1 = arith.constant 0 : i32
    return %c0_i32, %c0_i32_0 : i32, i32
  }
  func.func @transform_2(%arg0: i32) -> (i32, i32) {
    %c0_i32 = arith.constant 0 : i32
    %c0_i32_0 = arith.constant 0 : i32
    %c0_i32_1 = arith.constant 0 : i32
    return %c0_i32, %c0_i32_0 : i32, i32
  }
  func.func @transform_3(%arg0: i32) -> (i32, i32) {
    %c0_i32 = arith.constant 0 : i32
    %c0_i32_0 = arith.constant 0 : i32
    %c0_i32_1 = arith.constant 0 : i32
    return %c0_i32, %c0_i32_0 : i32, i32
  }
  func.func @transform_4(%arg0: i32) -> (i32, i32) {
    %c0_i32 = arith.constant 0 : i32
    %c0_i32_0 = arith.constant 0 : i32
    %c0_i32_1 = arith.constant 0 : i32
    return %c0_i32, %c0_i32_0 : i32, i32
  }
  func.func @transform_5(%arg0: i32) -> (i32, i32) {
    %c0_i32 = arith.constant 0 : i32
    %c0_i32_0 = arith.constant 0 : i32
    %c0_i32_1 = arith.constant 0 : i32
    return %c0_i32, %c0_i32_0 : i32, i32
  }
  func.func @transform_6(%arg0: i32) -> (i32, i32) {
    %c0_i32 = arith.constant 0 : i32
    %c0_i32_0 = arith.constant 0 : i32
    %c0_i32_1 = arith.constant 0 : i32
    return %c0_i32, %c0_i32_0 : i32, i32
  }
  func.func @transform_7(%arg0: i32) -> (i32, i32) {
    %c0_i32 = arith.constant 0 : i32
    %c0_i32_0 = arith.constant 0 : i32
    return %arg0, %c0_i32 : i32, i32
  }
}

</mosaic_0001>

<llo_original>
// kernel: tpu_custom_call.1
$region0: #{tpu_custom_call.1}
  #allocation0 [shape = 'u32[]', space=smem, size = 0x4, offset = 0x4, fixed_abs, tag = 'smem constant byte address 0x4 - core index']
  #allocation1 [shape = 'u32[144,128]{1,0:T(1,128)}', space=vmem, size = 0x12000, scoped, tag = 'internal scratch']
  %s0 = inlined_call_operand.hbm [shape: f32[8,16], index: 0, kind: input, shape index: {}]
  %s1 = inlined_call_operand.hbm [shape: bf16[16,32], index: 1, kind: input, shape index: {}]
  %s2 = inlined_call_operand.vmem [shape: f32[1,32], index: 2, kind: input, shape index: {}]
  %s3 = inlined_call_operand.hbm [shape: bf16[32,32], index: 3, kind: input, shape index: {}]
  %s4 = inlined_call_operand.vmem [shape: f32[1,32], index: 4, kind: input, shape index: {}]
  %s5 = inlined_call_operand.hbm [shape: bf16[32,128], index: 5, kind: input, shape index: {}]
  %s6 = inlined_call_operand.vmem [shape: f32[1,128], index: 6, kind: input, shape index: {}]
  %s7 = inlined_call_operand.hbm [shape: f32[8,128], index: 7, kind: output, shape index: {}]
  %s8 = sld [smem:[#allocation0]]
  $region54: #{tpu_custom_call.1} parent=0
    _
  %s10 = ssub.s32 1, %s8
  %s11 = scalar_select 0, %s10, %s8
  $region1: #{tpu_custom_call.1} parent=0
    #allocation2 [shape = 'u8[4096]{0}', space=vmem, size = 0x1000, scoped, tag = 'input window, operand 0, single buffered']
    #allocation3 [shape = 's32[1]{0}', space=sflag, size = 0x4, scoped, tag = 'scoped memory for tpu_custom_call.1']
    #allocation4 [shape = 's32[1]{0}', space=sflag, size = 0x4, scoped, tag = 'scoped memory for tpu_custom_call.1']
    #allocation5 [shape = 'u8[4096]{0}', space=vmem, size = 0x1000, scoped, tag = 'input window, operand 1, single buffered']
    #allocation6 [shape = 's32[1]{0}', space=sflag, size = 0x4, scoped, tag = 'scoped memory for tpu_custom_call.1']
    #allocation7 [shape = 'u8[8192]{0}', space=vmem, size = 0x2000, scoped, tag = 'input window, operand 3, single buffered']
    #allocation8 [shape = 'u8[8192]{0}', space=vmem, size = 0x2000, scoped, tag = 'input window, operand 5, single buffered']
    #allocation9 [shape = 's32[1]{0}', space=sflag, size = 0x4, scoped, tag = 'scoped memory for tpu_custom_call.1']
    #allocation10 [shape = 'u8[4096]{0}', space=vmem, size = 0x1000, scoped, tag = 'output window, operand 0, single buffered']
    %12 = vsyncpa [#allocation3], 0
    %13 = vsyncpa [#allocation6], 0
    %14 = vsyncpa [#allocation9], 0
    %15 = vsyncpa [#allocation4], 0
    // Predicated region
    $region2: #{tpu_custom_call.1} parent=1 // pred_check
      _
    $region3: #{tpu_custom_call.1} parent=1 // pred_check_branch
      %17 = sbr.rel (0) target = $region5
    $region4: #{tpu_custom_call.1} parent=1 // pred_region
      %s19 = ssub.s32 128, 128
      %20 = vsyncadd [#allocation3], %s19
      %s22 = sshll.u32 [#allocation2], 4
      %s23 = int_to_ptr.vmem [resolvable:$true] %s22
      %25 = dma.hbm_to_vmem [thread:$0]  %s0, 128, %s23, [#allocation3]
    $region5: #{tpu_custom_call.1} parent=1 // pred_fallthru
      _
    // Predicated region
    $region6: #{tpu_custom_call.1} parent=1 // pred_check
      _
    $region7: #{tpu_custom_call.1} parent=1 // pred_check_branch
      %27 = sbr.rel (0) target = $region9
    $region8: #{tpu_custom_call.1} parent=1 // pred_region
      %s29 = ssub.s32 128, 128
      %30 = vsyncadd [#allocation6], %s29
      %s31 = sshll.u32 [#allocation5], 4
      %s32 = int_to_ptr.vmem [resolvable:$true] %s31
      %37 = dma.hbm_to_vmem [thread:$0]  %s1, 128, %s32, [#allocation6], 64, 64, 4
    $region9: #{tpu_custom_call.1} parent=1 // pred_fallthru
      _
    // Predicated region
    $region10: #{tpu_custom_call.1} parent=1 // pred_check
      _
    $region11: #{tpu_custom_call.1} parent=1 // pred_check_branch
      %39 = sbr.rel (0) target = $region13
    $region12: #{tpu_custom_call.1} parent=1 // pred_region
      _
    $region13: #{tpu_custom_call.1} parent=1 // pred_fallthru
      _
    // Predicated region
    $region14: #{tpu_custom_call.1} parent=1 // pred_check
      _
    $region15: #{tpu_custom_call.1} parent=1 // pred_check_branch
      %41 = sbr.rel (0) target = $region17
    $region16: #{tpu_custom_call.1} parent=1 // pred_region
      %s43 = ssub.s32 256, 256
      %44 = vsyncadd [#allocation6], %s43
      %s45 = sshll.u32 [#allocation7], 4
      %s46 = int_to_ptr.vmem [resolvable:$true] %s45
      %51 = dma.hbm_to_vmem [thread:$0]  %s3, 256, %s46, [#allocation6], 64, 64, 4
    $region17: #{tpu_custom_call.1} parent=1 // pred_fallthru
      _
    // Predicated region
    $region18: #{tpu_custom_call.1} parent=1 // pred_check
      _
    $region19: #{tpu_custom_call.1} parent=1 // pred_check_branch
      %53 = sbr.rel (0) target = $region21
    $region20: #{tpu_custom_call.1} parent=1 // pred_region
      _
    $region21: #{tpu_custom_call.1} parent=1 // pred_fallthru
      _
    // Predicated region
    $region22: #{tpu_custom_call.1} parent=1 // pred_check
      _
    $region23: #{tpu_custom_call.1} parent=1 // pred_check_branch
      %55 = sbr.rel (0) target = $region25
    $region24: #{tpu_custom_call.1} parent=1 // pred_region
      %s57 = ssub.s32 256, 256
      %58 = vsyncadd [#allocation9], %s57
      %s59 = sshll.u32 [#allocation8], 4
      %s60 = int_to_ptr.vmem [resolvable:$true] %s59
      %65 = dma.hbm_to_vmem [thread:$0]  %s5, 256, %s60, [#allocation9], 64, 64, 4
    $region25: #{tpu_custom_call.1} parent=1 // pred_fallthru
      _
    // Predicated region
    $region26: #{tpu_custom_call.1} parent=1 // pred_check
      _
    $region27: #{tpu_custom_call.1} parent=1 // pred_check_branch
      %67 = sbr.rel (0) target = $region29
    $region28: #{tpu_custom_call.1} parent=1 // pred_region
      _
    $region29: #{tpu_custom_call.1} parent=1 // pred_fallthru
      _
    // Predicated region
    $region30: #{tpu_custom_call.1} parent=1 // pred_check
      _
    $region31: #{tpu_custom_call.1} parent=1 // pred_check_branch
      %69 = sbr.rel (0) target = $region33
    $region32: #{tpu_custom_call.1} parent=1 // pred_region
      %70 = dma.done [#allocation3], 128
    $region33: #{tpu_custom_call.1} parent=1 // pred_fallthru
      _
    // Predicated region
    $region34: #{tpu_custom_call.1} parent=1 // pred_check
      _
    $region35: #{tpu_custom_call.1} parent=1 // pred_check_branch
      %72 = sbr.rel (0) target = $region37
    $region36: #{tpu_custom_call.1} parent=1 // pred_region
      %73 = dma.done [#allocation6], 128
    $region37: #{tpu_custom_call.1} parent=1 // pred_fallthru
      _
    // Predicated region
    $region38: #{tpu_custom_call.1} parent=1 // pred_check
      _
    $region39: #{tpu_custom_call.1} parent=1 // pred_check_branch
      %75 = sbr.rel (0) target = $region41
    $region40: #{tpu_custom_call.1} parent=1 // pred_region
      %76 = dma.done [#allocation6], 256
    $region41: #{tpu_custom_call.1} parent=1 // pred_fallthru
      _
    // Predicated region
    $region42: #{tpu_custom_call.1} parent=1 // pred_check
      _
    $region43: #{tpu_custom_call.1} parent=1 // pred_check_branch
      %78 = sbr.rel (0) target = $region45
    $region44: #{tpu_custom_call.1} parent=1 // pred_region
      %79 = dma.done [#allocation9], 256
    $region45: #{tpu_custom_call.1} parent=1 // pred_fallthru
      _
    %v81 = vld [vmem:[#allocation2] sm:$0xff]
    %v82 = vpack.c.bf16 %v81, %v81
    %v83 = vld [vmem:[#allocation5] sm:$0xf]
    %v84 = vld [vmem:[#allocation5 + $0x4] sm:$0xf]
    %v85 = vld [vmem:[%s2] sm:$0x1]
    %v87 = vlaneseq
    %v88 = vshrl.u32 %v87, 7
    %v89 = vsub.s32 0, %v88
    %v90 = vrot.slane %v85, %v89
    %v94 = vunpack.c.l.b16 %v83
    %v95 = vunpack.c.l.b16 %v84
    %v96 = vpack.c.b16 %v95, %v94
    %vm98 = vcmask 130048
    %v100 = vsel %vm98, %v82, 0
    %102 = vmatprep.subr.bf16.mxu0 0
    %103 = vmatpush1.bf16.msra.mxu0 0
    %104 = vmatprep.subr.bf16.mxu0 0
    %105 = vmatpush1.bf16.msra.mxu0 0
    %106 = vmatprep.subr.bf16.mxu0 0
    %107 = vmatpush1.bf16.msra.mxu0 0
    %108 = vmatprep.subr.bf16.mxu0 0
    %109 = vmatpush1.bf16.msra.mxu0 0
    %110 = vmatprep.subr.bf16.mxu0 0
    %111 = vmatpush1.bf16.msra.mxu0 0
    %112 = vmatprep.subr.bf16.mxu0 0
    %113 = vmatpush1.bf16.msra.mxu0 0
    %114 = vmatprep.subr.bf16.mxu0 0
    %115 = vmatpush1.bf16.msra.mxu0 0
    %116 = vmatprep.subr.bf16.mxu0 0
    %117 = vmatpush1.bf16.msra.mxu0 %v96
    %118 = vmatprep.subr.bf16.mxu0 0
    %119 = vmatpush2.bf16.msra.mxu0 0
    %120 = vmatprep.subr.bf16.mxu0 0
    %121 = vmatpush2.bf16.msra.mxu0 0
    %122 = vmatprep.subr.bf16.mxu0 0
    %123 = vmatpush2.bf16.msra.mxu0 0
    %124 = vmatprep.subr.bf16.mxu0 0
    %125 = vmatpush2.bf16.msra.mxu0 0
    %126 = vmatprep.subr.bf16.mxu0 0
    %127 = vmatpush2.bf16.msra.mxu0 0
    %128 = vmatprep.subr.bf16.mxu0 0
    %129 = vmatpush2.bf16.msra.mxu0 0
    %130 = vmatprep.subr.bf16.mxu0 0
    %131 = vmatpush2.bf16.msra.mxu0 0
    %132 = vmatprep.subr.bf16.mxu0 0
    %133 = vmatpush2.bf16.msra.mxu0 0
    %134 = vmatprep.mubr.bf16.mxu0 0
    %135 = vmatmul.mubr.bf16.gmra.mxu0 %v100
    %v136 = vpop.f32.mrf.mxu0
    %v137 = vadd.f32 %v90, %v136
    %v138 = vpop.f32.mrf.mxu0
    %v139 = vpop.f32.mrf.mxu0
    %v140 = vpop.f32.mrf.mxu0
    %141 = vdwg.mxu0
    %v142 = vtanh.pop %v137
    %v143 = vpack.c.bf16 %v142, %v142
    %v144 = vld [vmem:[#allocation7] sm:$0xf]
    %v145 = vld [vmem:[#allocation7 + $0x4] sm:$0xf]
    %v146 = vld [vmem:[#allocation7 + $0x8] sm:$0xf]
    %v147 = vld [vmem:[#allocation7 + $0xc] sm:$0xf]
    %v148 = vld [vmem:[%s4] sm:$0x1]
    %v150 = vlaneseq
    %v151 = vshrl.u32 %v150, 7
    %v152 = vsub.s32 0, %v151
    %v153 = vrot.slane %v148, %v152
    %v159 = vunpack.c.l.b16 %v144
    %v160 = vunpack.c.l.b16 %v145
    %v161 = vunpack.c.l.b16 %v146
    %v162 = vunpack.c.l.b16 %v147
    %v163 = vpack.c.b16 %v160, %v159
    %v164 = vpack.c.b16 %v162, %v161
    %vm167 = vcmask 261120
    %v169 = vsel %vm167, %v143, 0
    %171 = vmatprep.subr.bf16.mxu0 0
    %172 = vmatpush1.bf16.msra.mxu0 0
    %173 = vmatprep.subr.bf16.mxu0 0
    %174 = vmatpush1.bf16.msra.mxu0 0
    %175 = vmatprep.subr.bf16.mxu0 0
    %176 = vmatpush1.bf16.msra.mxu0 0
    %177 = vmatprep.subr.bf16.mxu0 0
    %178 = vmatpush1.bf16.msra.mxu0 0
    %179 = vmatprep.subr.bf16.mxu0 0
    %180 = vmatpush1.bf16.msra.mxu0 0
    %181 = vmatprep.subr.bf16.mxu0 0
    %182 = vmatpush1.bf16.msra.mxu0 0
    %183 = vmatprep.subr.bf16.mxu0 0
    %184 = vmatpush1.bf16.msra.mxu0 %v164
    %185 = vmatprep.subr.bf16.mxu0 0
    %186 = vmatpush1.bf16.msra.mxu0 %v163
    %187 = vmatprep.subr.bf16.mxu0 0
    %188 = vmatpush2.bf16.msra.mxu0 0
    %189 = vmatprep.subr.bf16.mxu0 0
    %190 = vmatpush2.bf16.msra.mxu0 0
    %191 = vmatprep.subr.bf16.mxu0 0
    %192 = vmatpush2.bf16.msra.mxu0 0
    %193 = vmatprep.subr.bf16.mxu0 0
    %194 = vmatpush2.bf16.msra.mxu0 0
    %195 = vmatprep.subr.bf16.mxu0 0
    %196 = vmatpush2.bf16.msra.mxu0 0
    %197 = vmatprep.subr.bf16.mxu0 0
    %198 = vmatpush2.bf16.msra.mxu0 0
    %199 = vmatprep.subr.bf16.mxu0 0
    %200 = vmatpush2.bf16.msra.mxu0 0
    %201 = vmatprep.subr.bf16.mxu0 0
    %202 = vmatpush2.bf16.msra.mxu0 0
    %203 = vmatprep.mubr.bf16.mxu0 0
    %204 = vmatmul.mubr.bf16.gmra.mxu0 %v169
    %v205 = vpop.f32.mrf.mxu0
    %v206 = vadd.f32 %v153, %v205
    %v207 = vpop.f32.mrf.mxu0
    %v208 = vpop.f32.mrf.mxu0
    %v209 = vpop.f32.mrf.mxu0
    %210 = vdwg.mxu0
    %v211 = vtanh.pop %v206
    %v212 = vpack.c.bf16 %v211, %v211
    %v213 = vld [vmem:[#allocation8] sm:$0xf]
    %v214 = vld [vmem:[#allocation8 + $0x4] sm:$0xf]
    %v215 = vld [vmem:[#allocation8 + $0x8] sm:$0xf]
    %v216 = vld [vmem:[#allocation8 + $0xc] sm:$0xf]
    %v217 = vld [vmem:[%s6] sm:$0x1]
    %v219 = vlaneseq
    %v220 = vshrl.u32 %v219, 7
    %v221 = vsub.s32 0, %v220
    %v222 = vrot.slane %v217, %v221
    %v228 = vunpack.c.l.b16 %v213
    %v229 = vunpack.c.l.b16 %v214
    %v230 = vunpack.c.l.b16 %v215
    %v231 = vunpack.c.l.b16 %v216
    %v232 = vpack.c.b16 %v229, %v228
    %v233 = vpack.c.b16 %v231, %v230
    %v237 = vsel %vm167, %v212, 0
    %239 = vmatprep.subr.bf16.mxu0 0
    %240 = vmatpush1.bf16.msra.mxu0 0
    %241 = vmatprep.subr.bf16.mxu0 0
    %242 = vmatpush1.bf16.msra.mxu0 0
    %243 = vmatprep.subr.bf16.mxu0 0
    %244 = vmatpush1.bf16.msra.mxu0 0
    %245 = vmatprep.subr.bf16.mxu0 0
    %246 = vmatpush1.bf16.msra.mxu0 0
    %247 = vmatprep.subr.bf16.mxu0 0
    %248 = vmatpush1.bf16.msra.mxu0 0
    %249 = vmatprep.subr.bf16.mxu0 0
    %250 = vmatpush1.bf16.msra.mxu0 0
    %251 = vmatprep.subr.bf16.mxu0 0
    %252 = vmatpush1.bf16.msra.mxu0 %v233
    %253 = vmatprep.subr.bf16.mxu0 0
    %254 = vmatpush1.bf16.msra.mxu0 %v232
    %255 = vmatprep.subr.bf16.mxu0 0
    %256 = vmatpush2.bf16.msra.mxu0 0
    %257 = vmatprep.subr.bf16.mxu0 0
    %258 = vmatpush2.bf16.msra.mxu0 0
    %259 = vmatprep.subr.bf16.mxu0 0
    %260 = vmatpush2.bf16.msra.mxu0 0
    %261 = vmatprep.subr.bf16.mxu0 0
    %262 = vmatpush2.bf16.msra.mxu0 0
    %263 = vmatprep.subr.bf16.mxu0 0
    %264 = vmatpush2.bf16.msra.mxu0 0
    %265 = vmatprep.subr.bf16.mxu0 0
    %266 = vmatpush2.bf16.msra.mxu0 0
    %267 = vmatprep.subr.bf16.mxu0 0
    %268 = vmatpush2.bf16.msra.mxu0 0
    %269 = vmatprep.subr.bf16.mxu0 0
    %270 = vmatpush2.bf16.msra.mxu0 0
    %271 = vmatprep.mubr.bf16.mxu0 0
    %272 = vmatmul.mubr.bf16.gmra.mxu0 %v237
    %v273 = vpop.f32.mrf.mxu0
    %v274 = vadd.f32 %v222, %v273
    %v275 = vpop.f32.mrf.mxu0
    %v276 = vpop.f32.mrf.mxu0
    %v277 = vpop.f32.mrf.mxu0
    %278 = vdwg.mxu0
    %279 = vst [vmem:[#allocation10] sm:$0xff] %v274
    // Predicated region
    $region46: #{tpu_custom_call.1} parent=1 // pred_check
      _
    $region47: #{tpu_custom_call.1} parent=1 // pred_check_branch
      %281 = sbr.rel (0) target = $region49
    $region48: #{tpu_custom_call.1} parent=1 // pred_region
      %s283 = ssub.s32 128, 128
      %284 = vsyncadd [#allocation4], %s283
      %s286 = sshll.u32 [#allocation10], 4
      %s287 = int_to_ptr.vmem [resolvable:$true] %s286
      %289 = dma.vmem_to_hbm [thread:$0]  %s287, 128, %s7, [#allocation4]
    $region49: #{tpu_custom_call.1} parent=1 // pred_fallthru
      _
    // Predicated region
    $region50: #{tpu_custom_call.1} parent=1 // pred_check
      _
    $region51: #{tpu_custom_call.1} parent=1 // pred_check_branch
      %291 = sbr.rel (0) target = $region53
    $region52: #{tpu_custom_call.1} parent=1 // pred_region
      %292 = dma.done [#allocation4], 128
    $region53: #{tpu_custom_call.1} parent=1 // pred_fallthru
      _
    %293 = vsyncpa [#allocation3], 1
    %294 = vsyncpa [#allocation6], 1
    %295 = vsyncpa [#allocation9], 1
    %296 = vsyncpa [#allocation4], 1

</llo_original>
